<compile_context>
chip_gen: v7x
topology: tpu7x:2x2x1
jax: 0.10.0
libtpu: 0.0.40
codegen_flags: <defaults>
</compile_context>

<pallas_src>
import functools

import jax
import jax.numpy as jnp
from jax.experimental import pallas as pl
from jax.experimental.pallas import tpu as pltpu


def _pitch_roll_kernel(shift_ref, x_hbm, o_hbm, buf, wrap, sems, *, m, h, wt, nw):
    """Roll one (C, H, wt) sample tile along H by a per-sample shift, in place.

    shift_ref : SMEM (B,) int32, shift[b] in [-m, m]   (0 => leave sample alone)
    x_hbm     : ANY  (B, C, H, W) input  (raw HBM, aliased with o_hbm)
    o_hbm     : ANY  (B, C, H, W) output (raw HBM, aliased with x_hbm)
    buf       : VMEM (C, H, wt)   staging buffer, filled already-rolled
    wrap      : VMEM (C, 4m, wt)  wraparound rows, wrap[u] = x[(H-2m+u) mod H]
    sems      : DMA semaphores (4,)

    Decomposition of out[j] = x[(j - shift) mod H], with mid = m - shift in [0, 2m]:
      out[m:H-m]  = x[mid : mid + H - 2m]      (bulk — absorbed into the read DMA)
      out[0:m]    = wrap[mid + m : mid + 2m]   (tiny in-core copy)
      out[H-m:H]  = wrap[mid     : mid + m]    (tiny in-core copy)
    """
    b = pl.program_id(0)
    shift = shift_ref[b]

    if nw == 1:
        w_sl = slice(None)                      # full W, static
    else:
        w_sl = pl.ds(pl.multiple_of(pl.program_id(1) * wt, wt), wt)

    @pl.when(shift != 0)
    def _():
        mid = m - shift                         # in [0, 2m], != m here

        # Bulk rows arrive pre-rolled straight from HBM (offset lives in the DMA).
        bulk = pltpu.make_async_copy(
            x_hbm.at[b, :, pl.ds(mid, h - 2 * m), w_sl],
            buf.at[:, m:h - m, :],
            sems.at[0])
        # Wraparound rows: last 2m and first 2m rows of x.
        lo = pltpu.make_async_copy(
            x_hbm.at[b, :, h - 2 * m:h, w_sl], wrap.at[:, 0:2 * m, :], sems.at[1])
        hi = pltpu.make_async_copy(
            x_hbm.at[b, :, 0:2 * m, w_sl], wrap.at[:, 2 * m:4 * m, :], sems.at[2])
        bulk.start(); lo.start(); hi.start()

        lo.wait(); hi.wait()
        # Only 2m rows of in-core vector work per sample tile.
        buf[:, 0:m, :] = wrap[:, pl.ds(mid + m, m), :]
        buf[:, h - m:h, :] = wrap[:, pl.ds(mid, m), :]
        bulk.wait()

        # One aligned, contiguous write-back of the whole rolled tile.
        out_cp = pltpu.make_async_copy(buf, o_hbm.at[b, :, :, w_sl], sems.at[3])
        out_cp.start(); out_cp.wait()
        # shift == 0 samples: nothing is read or written — the aliased output
        # buffer already holds the input data.


def _choose_w_tile(C, H, W, itemsize, m, budget_bytes):
    """Pick a lane tile wt so the single-buffered scratch (buf + wrap) fits the
    budget on every generation's scoped-VMEM default.  Returns (wt, vmem_limit)
    where vmem_limit is None unless we must override the scoped default."""
    def working_set(wt):
        return C * (H + 4 * m) * wt * itemsize

    if working_set(W) <= budget_bytes:
        return W, None
    for cand in (2048, 1024, 512, 256, 128):
        if W % cand == 0 and working_set(cand) <= budget_bytes:
            return cand, None
    # Awkward W (no 128-multiple divisor) with a huge sample: keep full W but
    # raise the scoped-VMEM limit explicitly instead of failing compilation.
    return W, int(working_set(W) * 1.25) + (1 << 20)


def aug_pitch_shift(x, shifts, max_shifts):
    """Per-sample roll of x (B, C, H, W) along H by shifts (B,) in [-m, m].

    The output aliases the input; donate x for true in-place (zero traffic on
    unshifted samples)."""
    B, C, H, W = x.shape
    m = int(max_shifts)
    assert m >= 1 and H > 2 * m
    itemsize = jnp.dtype(x.dtype).itemsize

    shifts = jnp.clip(shifts.astype(jnp.int32), -m, m)   # guard against OOB DMA

    wt, vmem_limit = _choose_w_tile(C, H, W, itemsize, m, budget_bytes=8 << 20)
    nw = W // wt
    grid = (B,) if nw == 1 else (B, nw)

    kernel = functools.partial(_pitch_roll_kernel, m=m, h=H, wt=wt, nw=nw)
    return pl.pallas_call(
        kernel,
        out_shape=jax.ShapeDtypeStruct((B, C, H, W), x.dtype),
        grid=grid,
        in_specs=[
            pl.BlockSpec(memory_space=pltpu.MemorySpace.SMEM),   # shifts (B,)
            pl.BlockSpec(memory_space=pl.ANY),                   # x, raw HBM
        ],
        out_specs=pl.BlockSpec(memory_space=pl.ANY),             # out, raw HBM
        scratch_shapes=[
            pltpu.VMEM((C, H, wt), x.dtype),                     # buf
            pltpu.VMEM((C, 4 * m, wt), x.dtype),                 # wrap rows
            pltpu.SemaphoreType.DMA((4,)),
        ],
        input_output_aliases={1: 0},                             # x  <->  out
        compiler_params=pltpu.CompilerParams(
            dimension_semantics=("parallel",) * len(grid),
            vmem_limit_bytes=vmem_limit,
        ),
        cost_estimate=pl.CostEstimate(
            flops=0, transcendentals=0,
            bytes_accessed=B * C * H * W * itemsize),
    )(shifts, x)


def aug_forward(x, key):
    """Deterministic replay of AUG.forward's random decisions + Pallas roll."""
    B, C, H, W = x.shape
    k_gate, k_shift = jax.random.split(key, 2)

    # if random.uniform(0,1) < 0.5: apply pitch shift
    apply_pitch = jax.random.uniform(k_gate, (B,)) < 0.5
    max_shifts = H // 50
    if max_shifts == 0:
        # random.randint(-0, 0) == 0 -> roll by 0 is the identity.
        return x, jnp.zeros((B,), jnp.int32)

    # random.randint(-max_shifts, max_shifts) is inclusive of both ends.
    shifts = jax.random.randint(k_shift, (B,), -max_shifts, max_shifts + 1)
    shifts = jnp.where(apply_pitch, shifts, 0).astype(jnp.int32)

    return aug_pitch_shift(x, shifts, max_shifts), shifts


if __name__ == "__main__":
    # H=W=128 matches the module's 128x128 spectrograms (max_shifts = 2).
    B, C, H, W = 2, 4, 128, 128
    key = jax.random.PRNGKey(0)
    k_data, k_aug, k_data2 = jax.random.split(key, 3)
    x = jax.random.normal(k_data, (B, C, H, W), dtype=jnp.float32)

    # --- Test 1: faithful module replay (non-donated input; XLA inserts one
    # defensive copy to honor the alias, semantics identical to out-of-place).
    out, shifts = aug_forward(x, k_aug)
    out = jax.block_until_ready(out)
    ref = jnp.stack(
        [jnp.roll(x[i], int(shifts[i]), axis=1) for i in range(B)], axis=0)
    assert out.shape == x.shape and out.dtype == x.dtype
    assert jnp.allclose(out, ref), "Pallas roll mismatch vs jnp.roll reference"

    # --- Test 2: forced shifts covering every branch (0, +1, -m, +m) through
    # the donated, true in-place path (zero traffic for the shift==0 sample).
    B2 = 4
    x2 = jax.random.normal(k_data2, (B2, C, H, W), dtype=jnp.float32)
    forced = jnp.array([0, 1, -2, 2], dtype=jnp.int32)          # m = 128//50 = 2
    ref2 = jnp.stack(
        [jnp.roll(x2[i], int(forced[i]), axis=1) for i in range(B2)], axis=0)
    ref2 = jax.block_until_ready(ref2)
    apply_fn = jax.jit(functools.partial(aug_pitch_shift, max_shifts=H // 50),
                       donate_argnums=0)
    out2 = jax.block_until_ready(apply_fn(x2, forced))           # x2 donated
    assert jnp.allclose(out2, ref2), "Pallas roll mismatch on forced shifts"

    print("KERNEL_OK")
</pallas_src>

<mosaic_0001>
module attributes {stable_mosaic.version = 11 : i64} {
  func.func @_pitch_roll_kernel(%arg0: i32, %arg1: memref<2xi32, #tpu.memory_space<smem>>, %arg2: memref<2x4x128x128xf32, #tpu.memory_space<any>>, %arg3: memref<2x4x128x128xf32, #tpu.memory_space<any>>, %arg4: memref<4x128x128xf32, #tpu.memory_space<vmem>>, %arg5: memref<4x8x128xf32, #tpu.memory_space<vmem>>, %arg6: memref<4x!tpu.dma_semaphore, #tpu.memory_space<semaphore_mem>>) attributes {dimension_semantics = [#tpu.dimension_semantics<parallel>], iteration_bounds = array<i64: 2>, scalar_prefetch = 0 : i64, scratch_operands = 3 : i64, tpu.core_type = #tpu.core_type<tc>, window_params = [{transform_indices = @transform_0, window_bounds = array<i64: 2>}, {}, {}]} {
    %0 = arith.index_cast %arg0 : i32 to index
    %1 = memref.load %arg1[%0] : memref<2xi32, #tpu.memory_space<smem>>
    %c0_i32 = arith.constant 0 : i32
    %2 = arith.cmpi ne, %1, %c0_i32 : i32
    %3 = arith.extui %2 : i1 to i32
    %c0_i32_0 = arith.constant 0 : i32
    %4 = arith.cmpi ne, %3, %c0_i32_0 : i32
    scf.if %4 {
      %c2_i32 = arith.constant 2 : i32
      %5 = arith.subi %c2_i32, %1 : i32
      %c0_i32_1 = arith.constant 0 : i32
      %c0_i32_2 = arith.constant 0 : i32
      %c0_i32_3 = arith.constant 0 : i32
      %6 = tpu.memref_slice %arg2[%arg0, %c0_i32_2, %5, %c0_i32_3] : memref<2x4x128x128xf32, #tpu.memory_space<any>> -> memref<1x4x124x128xf32, #tpu.memory_space<any>>
      %7 = tpu.memref_squeeze %6 : memref<1x4x124x128xf32, #tpu.memory_space<any>> -> memref<4x124x128xf32, #tpu.memory_space<any>>
      %c0_i32_4 = arith.constant 0 : i32
      %c2_i32_5 = arith.constant 2 : i32
      %c0_i32_6 = arith.constant 0 : i32
      %8 = tpu.memref_slice %arg4[%c0_i32_4, %c2_i32_5, %c0_i32_6] : memref<4x128x128xf32, #tpu.memory_space<vmem>> -> memref<4x124x128xf32, #tpu.memory_space<vmem>>
      %9 = tpu.memref_slice %arg6[%c0_i32_1] : memref<4x!tpu.dma_semaphore, #tpu.memory_space<semaphore_mem>> -> memref<1x!tpu.dma_semaphore, #tpu.memory_space<semaphore_mem>>
      %10 = tpu.memref_squeeze %9 : memref<1x!tpu.dma_semaphore, #tpu.memory_space<semaphore_mem>> -> memref<!tpu.dma_semaphore, #tpu.memory_space<semaphore_mem>>
      tpu.enqueue_dma source(%7 : memref<4x124x128xf32, #tpu.memory_space<any>>) target(%8 : memref<4x124x128xf32, #tpu.memory_space<vmem>>) target_semaphore(%10 : memref<!tpu.dma_semaphore, #tpu.memory_space<semaphore_mem>>)
      %c1_i32 = arith.constant 1 : i32
      %c0_i32_7 = arith.constant 0 : i32
      %c124_i32 = arith.constant 124 : i32
      %c0_i32_8 = arith.constant 0 : i32
      %11 = tpu.memref_slice %arg2[%arg0, %c0_i32_7, %c124_i32, %c0_i32_8] : memref<2x4x128x128xf32, #tpu.memory_space<any>> -> memref<1x4x4x128xf32, #tpu.memory_space<any>>
      %12 = tpu.memref_squeeze %11 : memref<1x4x4x128xf32, #tpu.memory_space<any>> -> memref<4x4x128xf32, #tpu.memory_space<any>>
      %c0_i32_9 = arith.constant 0 : i32
      %c0_i32_10 = arith.constant 0 : i32
      %c0_i32_11 = arith.constant 0 : i32
      %13 = tpu.memref_slice %arg5[%c0_i32_9, %c0_i32_10, %c0_i32_11] : memref<4x8x128xf32, #tpu.memory_space<vmem>> -> memref<4x4x128xf32, #tpu.memory_space<vmem>>
      %14 = tpu.memref_slice %arg6[%c1_i32] : memref<4x!tpu.dma_semaphore, #tpu.memory_space<semaphore_mem>> -> memref<1x!tpu.dma_semaphore, #tpu.memory_space<semaphore_mem>>
      %15 = tpu.memref_squeeze %14 : memref<1x!tpu.dma_semaphore, #tpu.memory_space<semaphore_mem>> -> memref<!tpu.dma_semaphore, #tpu.memory_space<semaphore_mem>>
      tpu.enqueue_dma source(%12 : memref<4x4x128xf32, #tpu.memory_space<any>>) target(%13 : memref<4x4x128xf32, #tpu.memory_space<vmem>>) target_semaphore(%15 : memref<!tpu.dma_semaphore, #tpu.memory_space<semaphore_mem>>)
      %c2_i32_12 = arith.constant 2 : i32
      %c0_i32_13 = arith.constant 0 : i32
      %c0_i32_14 = arith.constant 0 : i32
      %c0_i32_15 = arith.constant 0 : i32
      %16 = tpu.memref_slice %arg2[%arg0, %c0_i32_13, %c0_i32_14, %c0_i32_15] : memref<2x4x128x128xf32, #tpu.memory_space<any>> -> memref<1x4x4x128xf32, #tpu.memory_space<any>>
      %17 = tpu.memref_squeeze %16 : memref<1x4x4x128xf32, #tpu.memory_space<any>> -> memref<4x4x128xf32, #tpu.memory_space<any>>
      %c0_i32_16 = arith.constant 0 : i32
      %c4_i32 = arith.constant 4 : i32
      %c0_i32_17 = arith.constant 0 : i32
      %18 = tpu.memref_slice %arg5[%c0_i32_16, %c4_i32, %c0_i32_17] : memref<4x8x128xf32, #tpu.memory_space<vmem>> -> memref<4x4x128xf32, #tpu.memory_space<vmem>>
      %19 = tpu.memref_slice %arg6[%c2_i32_12] : memref<4x!tpu.dma_semaphore, #tpu.memory_space<semaphore_mem>> -> memref<1x!tpu.dma_semaphore, #tpu.memory_space<semaphore_mem>>
      %20 = tpu.memref_squeeze %19 : memref<1x!tpu.dma_semaphore, #tpu.memory_space<semaphore_mem>> -> memref<!tpu.dma_semaphore, #tpu.memory_space<semaphore_mem>>
      tpu.enqueue_dma source(%17 : memref<4x4x128xf32, #tpu.memory_space<any>>) target(%18 : memref<4x4x128xf32, #tpu.memory_space<vmem>>) target_semaphore(%20 : memref<!tpu.dma_semaphore, #tpu.memory_space<semaphore_mem>>)
      %c1_i32_18 = arith.constant 1 : i32
      %c0_i32_19 = arith.constant 0 : i32
      %c124_i32_20 = arith.constant 124 : i32
      %c0_i32_21 = arith.constant 0 : i32
      %21 = tpu.memref_slice %arg2[%arg0, %c0_i32_19, %c124_i32_20, %c0_i32_21] : memref<2x4x128x128xf32, #tpu.memory_space<any>> -> memref<1x4x4x128xf32, #tpu.memory_space<any>>
      %22 = tpu.memref_squeeze %21 : memref<1x4x4x128xf32, #tpu.memory_space<any>> -> memref<4x4x128xf32, #tpu.memory_space<any>>
      %c0_i32_22 = arith.constant 0 : i32
      %c0_i32_23 = arith.constant 0 : i32
      %c0_i32_24 = arith.constant 0 : i32
      %23 = tpu.memref_slice %arg5[%c0_i32_22, %c0_i32_23, %c0_i32_24] : memref<4x8x128xf32, #tpu.memory_space<vmem>> -> memref<4x4x128xf32, #tpu.memory_space<vmem>>
      %24 = tpu.memref_slice %arg6[%c1_i32_18] : memref<4x!tpu.dma_semaphore, #tpu.memory_space<semaphore_mem>> -> memref<1x!tpu.dma_semaphore, #tpu.memory_space<semaphore_mem>>
      %25 = tpu.memref_squeeze %24 : memref<1x!tpu.dma_semaphore, #tpu.memory_space<semaphore_mem>> -> memref<!tpu.dma_semaphore, #tpu.memory_space<semaphore_mem>>
      tpu.wait_dma2 semaphore(%25 : memref<!tpu.dma_semaphore, #tpu.memory_space<semaphore_mem>>) src(%22 : memref<4x4x128xf32, #tpu.memory_space<any>>) dst(%23 : memref<4x4x128xf32, #tpu.memory_space<vmem>>)
      %c2_i32_25 = arith.constant 2 : i32
      %c0_i32_26 = arith.constant 0 : i32
      %c0_i32_27 = arith.constant 0 : i32
      %c0_i32_28 = arith.constant 0 : i32
      %26 = tpu.memref_slice %arg2[%arg0, %c0_i32_26, %c0_i32_27, %c0_i32_28] : memref<2x4x128x128xf32, #tpu.memory_space<any>> -> memref<1x4x4x128xf32, #tpu.memory_space<any>>
      %27 = tpu.memref_squeeze %26 : memref<1x4x4x128xf32, #tpu.memory_space<any>> -> memref<4x4x128xf32, #tpu.memory_space<any>>
      %c0_i32_29 = arith.constant 0 : i32
      %c4_i32_30 = arith.constant 4 : i32
      %c0_i32_31 = arith.constant 0 : i32
      %28 = tpu.memref_slice %arg5[%c0_i32_29, %c4_i32_30, %c0_i32_31] : memref<4x8x128xf32, #tpu.memory_space<vmem>> -> memref<4x4x128xf32, #tpu.memory_space<vmem>>
      %29 = tpu.memref_slice %arg6[%c2_i32_25] : memref<4x!tpu.dma_semaphore, #tpu.memory_space<semaphore_mem>> -> memref<1x!tpu.dma_semaphore, #tpu.memory_space<semaphore_mem>>
      %30 = tpu.memref_squeeze %29 : memref<1x!tpu.dma_semaphore, #tpu.memory_space<semaphore_mem>> -> memref<!tpu.dma_semaphore, #tpu.memory_space<semaphore_mem>>
      tpu.wait_dma2 semaphore(%30 : memref<!tpu.dma_semaphore, #tpu.memory_space<semaphore_mem>>) src(%27 : memref<4x4x128xf32, #tpu.memory_space<any>>) dst(%28 : memref<4x4x128xf32, #tpu.memory_space<vmem>>)
      %c2_i32_32 = arith.constant 2 : i32
      %31 = arith.addi %5, %c2_i32_32 : i32
      %c0 = arith.constant 0 : index
      %32 = arith.index_cast %31 : i32 to index
      %c0_33 = arith.constant 0 : index
      %33 = vector.load %arg5[%c0, %32, %c0_33] : memref<4x8x128xf32, #tpu.memory_space<vmem>>, vector<4x2x128xf32>
      %c0_34 = arith.constant 0 : index
      %c0_35 = arith.constant 0 : index
      %c0_36 = arith.constant 0 : index
      %34 = vector.load %arg4[%c0_34, %c0_35, %c0_36] : memref<4x128x128xf32, #tpu.memory_space<vmem>>, vector<4x2x128xf32>
      tpu.vector_store %arg4[%c0_34, %c0_35, %c0_36], %33 {strides = array<i32>} : memref<4x128x128xf32, #tpu.memory_space<vmem>>, vector<4x2x128xf32>,
      %c0_37 = arith.constant 0 : index
      %35 = arith.index_cast %5 : i32 to index
      %c0_38 = arith.constant 0 : index
      %36 = vector.load %arg5[%c0_37, %35, %c0_38] : memref<4x8x128xf32, #tpu.memory_space<vmem>>, vector<4x2x128xf32>
      %c0_39 = arith.constant 0 : index
      %c126 = arith.constant 126 : index
      %c0_40 = arith.constant 0 : index
      %37 = vector.load %arg4[%c0_39, %c126, %c0_40] : memref<4x128x128xf32, #tpu.memory_space<vmem>>, vector<4x2x128xf32>
      tpu.vector_store %arg4[%c0_39, %c126, %c0_40], %36 {strides = array<i32>} : memref<4x128x128xf32, #tpu.memory_space<vmem>>, vector<4x2x128xf32>,
      %c0_i32_41 = arith.constant 0 : i32
      %c0_i32_42 = arith.constant 0 : i32
      %c0_i32_43 = arith.constant 0 : i32
      %38 = tpu.memref_slice %arg2[%arg0, %c0_i32_42, %5, %c0_i32_43] : memref<2x4x128x128xf32, #tpu.memory_space<any>> -> memref<1x4x124x128xf32, #tpu.memory_space<any>>
      %39 = tpu.memref_squeeze %38 : memref<1x4x124x128xf32, #tpu.memory_space<any>> -> memref<4x124x128xf32, #tpu.memory_space<any>>
      %c0_i32_44 = arith.constant 0 : i32
      %c2_i32_45 = arith.constant 2 : i32
      %c0_i32_46 = arith.constant 0 : i32
      %40 = tpu.memref_slice %arg4[%c0_i32_44, %c2_i32_45, %c0_i32_46] : memref<4x128x128xf32, #tpu.memory_space<vmem>> -> memref<4x124x128xf32, #tpu.memory_space<vmem>>
      %41 = tpu.memref_slice %arg6[%c0_i32_41] : memref<4x!tpu.dma_semaphore, #tpu.memory_space<semaphore_mem>> -> memref<1x!tpu.dma_semaphore, #tpu.memory_space<semaphore_mem>>
      %42 = tpu.memref_squeeze %41 : memref<1x!tpu.dma_semaphore, #tpu.memory_space<semaphore_mem>> -> memref<!tpu.dma_semaphore, #tpu.memory_space<semaphore_mem>>
      tpu.wait_dma2 semaphore(%42 : memref<!tpu.dma_semaphore, #tpu.memory_space<semaphore_mem>>) src(%39 : memref<4x124x128xf32, #tpu.memory_space<any>>) dst(%40 : memref<4x124x128xf32, #tpu.memory_space<vmem>>)
      %c3_i32 = arith.constant 3 : i32
      %c0_i32_47 = arith.constant 0 : i32
      %c0_i32_48 = arith.constant 0 : i32
      %c0_i32_49 = arith.constant 0 : i32
      %43 = tpu.memref_slice %arg3[%arg0, %c0_i32_47, %c0_i32_48, %c0_i32_49] : memref<2x4x128x128xf32, #tpu.memory_space<any>> -> memref<1x4x128x128xf32, #tpu.memory_space<any>>
      %44 = tpu.memref_squeeze %43 : memref<1x4x128x128xf32, #tpu.memory_space<any>> -> memref<4x128x128xf32, #tpu.memory_space<any>>
      %45 = tpu.memref_slice %arg6[%c3_i32] : memref<4x!tpu.dma_semaphore, #tpu.memory_space<semaphore_mem>> -> memref<1x!tpu.dma_semaphore, #tpu.memory_space<semaphore_mem>>
      %46 = tpu.memref_squeeze %45 : memref<1x!tpu.dma_semaphore, #tpu.memory_space<semaphore_mem>> -> memref<!tpu.dma_semaphore, #tpu.memory_space<semaphore_mem>>
      tpu.enqueue_dma source(%arg4 : memref<4x128x128xf32, #tpu.memory_space<vmem>>) target(%44 : memref<4x128x128xf32, #tpu.memory_space<any>>) target_semaphore(%46 : memref<!tpu.dma_semaphore, #tpu.memory_space<semaphore_mem>>)
      %c3_i32_50 = arith.constant 3 : i32
      %c0_i32_51 = arith.constant 0 : i32
      %c0_i32_52 = arith.constant 0 : i32
      %c0_i32_53 = arith.constant 0 : i32
      %47 = tpu.memref_slice %arg3[%arg0, %c0_i32_51, %c0_i32_52, %c0_i32_53] : memref<2x4x128x128xf32, #tpu.memory_space<any>> -> memref<1x4x128x128xf32, #tpu.memory_space<any>>
      %48 = tpu.memref_squeeze %47 : memref<1x4x128x128xf32, #tpu.memory_space<any>> -> memref<4x128x128xf32, #tpu.memory_space<any>>
      %49 = tpu.memref_slice %arg6[%c3_i32_50] : memref<4x!tpu.dma_semaphore, #tpu.memory_space<semaphore_mem>> -> memref<1x!tpu.dma_semaphore, #tpu.memory_space<semaphore_mem>>
      %50 = tpu.memref_squeeze %49 : memref<1x!tpu.dma_semaphore, #tpu.memory_space<semaphore_mem>> -> memref<!tpu.dma_semaphore, #tpu.memory_space<semaphore_mem>>
      tpu.wait_dma2 semaphore(%50 : memref<!tpu.dma_semaphore, #tpu.memory_space<semaphore_mem>>) src(%arg4 : memref<4x128x128xf32, #tpu.memory_space<vmem>>) dst(%48 : memref<4x128x128xf32, #tpu.memory_space<any>>)
    } else {
    }
    return
  }
  func.func @transform_0(%arg0: i32) -> i32 {
    %c0_i32 = arith.constant 0 : i32
    %c0_i32_0 = arith.constant 0 : i32
    return %c0_i32 : i32
  }
}

</mosaic_0001>

<llo_original>
// kernel: tpu_custom_call.1
$region0: #{tpu_custom_call.1}
  #allocation0 [shape = 'u32[]', space=smem, size = 0x4, offset = 0x4, fixed_abs, tag = 'smem constant byte address 0x4 - core index']
  #allocation1 [shape = 'u32[144,128]{1,0:T(1,128)}', space=vmem, size = 0x12000, scoped, tag = 'internal scratch']
  #allocation2 [shape = 'f32[4,128,128]{2,1,0:T(8,128)}', space=vmem, size = 0x40000, scoped, tag = 'scratch operand']
  #allocation3 [shape = 'f32[4,8,128]{2,1,0:T(8,128)}', space=vmem, size = 0x4000, scoped, tag = 'scratch operand']
  #allocation4 [shape = 's32[4]{0}', space=sflag, size = 0x10, scoped, tag = 'scratch operand']
  #allocation7 [shape = 's32[]', space=sflag, size = 0x4, offset = 0, fixed_abs, tag = 'sflag constant byte address 0x0 - dummy sync flag']
  #allocation8 [shape = 's32[]', space=sflag, size = 0x4, offset = 0, fixed_abs, tag = 'sflag constant byte address 0x0 - dummy sync flag']
  #allocation9 [shape = 's32[]', space=sflag, size = 0x4, offset = 0, fixed_abs, tag = 'sflag constant byte address 0x0 - dummy sync flag']
  #allocation10 [shape = 's32[]', space=sflag, size = 0x4, offset = 0, fixed_abs, tag = 'sflag constant byte address 0x0 - dummy sync flag']
  #allocation11 [shape = 's32[]', space=sflag, size = 0x4, offset = 0, fixed_abs, tag = 'sflag constant byte address 0x0 - dummy sync flag']
  #allocation12 [shape = 'u32[]', space=smem, size = 0x4, offset = 0x44, fixed_abs, tag = 'smem constant byte address 0x44 - assertion arg 0']
  #allocation13 [shape = 'u32[]', space=smem, size = 0x4, offset = 0x48, fixed_abs, tag = 'smem constant byte address 0x48 - assertion arg 1']
  %s0 = inlined_call_operand.vmem [shape: s32[2], index: 0, kind: input, shape index: {}]
  %s1 = inlined_call_operand.hbm [shape: f32[2,4,128,128], index: 1, kind: input, shape index: {}, may-alias: {1,2}]
  %s2 = inlined_call_operand.hbm [shape: f32[2,4,128,128], index: 2, kind: output, shape index: {}, may-alias: {1,2}]
  %s3 = sld [smem:[#allocation0]]
  $region37: #{tpu_custom_call.1} parent=0
    _
  %s5 = ssub.s32 1, %s3
  %s6 = scalar_select 0, %s5, %s3
  $region1: #{tpu_custom_call.1} parent=0
    #allocation5 [shape = 'u8[512]{0}', space=smem, size = 0x200, scoped, tag = 'input window, operand 0, single buffered']
    #allocation6 [shape = 's32[2]{0}', space=sflag, size = 0x8, scoped, tag = 'scoped memory for tpu_custom_call.1']
    %7 = vsyncpa [#allocation6], 0
    loop: start=0, step=1, limit=3
    $region2: #{tpu_custom_call.1} parent=1 // loop_pre_header
      _
    $region3: #{tpu_custom_call.1} parent=1 // loop_header
      %s9 = sphi 0, %s13
      %p10 = scmp.ge.s32.totalorder %s9, 3
      %s16 = sphi 0, %s16
      %s18 = sphi 0, %s16
      %s26 = sphi 0, %s18
    $region4: #{tpu_custom_call.1} parent=1 // loop_header_branch
      %12 = sbr.rel (%p10) target = $region8
    $region5: #{tpu_custom_call.1} parent=1 // loop_body
      %s14 = ssub.s32 %s9, 1
      %s15 = sadd.s32 %s9, 1
      %s17 = sadd.s32 %s16, 1
      %p19 = scmp.eq.s32.totalorder %s9, 1
      %p20 = scmp.ne.s32.totalorder %s16, %s18
      %p21 = scmp.eq.s32.totalorder %s9, 0
      %p22 = por %p20, %p21
      %p23 = scmp.ne.s32.totalorder %s16, %s18
      %p24 = scmp.eq.s32.totalorder %s14, 1
      %p25 = por %p23, %p24
      %p27 = scmp.ne.s32.totalorder %s18, %s26
      %p28 = scmp.eq.s32.totalorder %s14, 0
      %p29 = por %p27, %p28
      %p30 = scmp.le.s32.totalorder 1, %s9
      // Predicated region
      $region9: #{tpu_custom_call.1} parent=5 // pred_check
        %p31 = pneg %p30
      $region10: #{tpu_custom_call.1} parent=5 // pred_check_branch
        %33 = sbr.rel (%p31) target = $region12
      $region11: #{tpu_custom_call.1} parent=5 // pred_region
        %s34 = ssub.s32 %s9, 1
        // Predicated region
        $region13: #{tpu_custom_call.1} parent=11 // pred_check
          %p35 = pneg %p29
        $region14: #{tpu_custom_call.1} parent=11 // pred_check_branch
          %37 = sbr.rel (%p35) target = $region16
        $region15: #{tpu_custom_call.1} parent=11 // pred_region
          %s39 = ssub.s32 16, 16
          %40 = vsyncadd [#allocation6], %s39
          %s42 = sshll.u32 %s0, 4
          %s43 = int_to_ptr.vmem [resolvable:$true] %s42
          %45 = dma.vmem_to_smem %s43, 16, [#allocation5], [#allocation6]
        $region16: #{tpu_custom_call.1} parent=11 // pred_fallthru
          _
      $region12: #{tpu_custom_call.1} parent=5 // pred_fallthru
        _
      %p46 = scmp.lt.s32.totalorder %s9, 2
      // Predicated region
      $region17: #{tpu_custom_call.1} parent=5 // pred_check
        %p47 = pneg %p46
      $region18: #{tpu_custom_call.1} parent=5 // pred_check_branch
        %49 = sbr.rel (%p47) target = $region20
      $region19: #{tpu_custom_call.1} parent=5 // pred_region
        _
      $region20: #{tpu_custom_call.1} parent=5 // pred_fallthru
        _
      %p50 = scmp.le.s32.totalorder 1, %s9
      // Predicated region
      $region21: #{tpu_custom_call.1} parent=5 // pred_check
        %p51 = pneg %p50
      $region22: #{tpu_custom_call.1} parent=5 // pred_check_branch
        %53 = sbr.rel (%p51) target = $region24
      $region23: #{tpu_custom_call.1} parent=5 // pred_region
        %s54 = ssub.s32 %s9, 1
        // Predicated region
        $region25: #{tpu_custom_call.1} parent=23 // pred_check
          %p55 = pneg %p29
        $region26: #{tpu_custom_call.1} parent=23 // pred_check_branch
          %57 = sbr.rel (%p55) target = $region28
        $region27: #{tpu_custom_call.1} parent=23 // pred_region
          %58 = dma.done [#allocation6], 16
        $region28: #{tpu_custom_call.1} parent=23 // pred_fallthru
          _
        %59 = sfence
        %p60 = pneg %p29
        %p61 = pneg %p25
        %s62 = sld [smem:[#allocation5 + %s14]]
        %p63 = scmp.ne.s32.totalorder %s62, 0
        // Predicated region
        $region29: #{tpu_custom_call.1} parent=23 // pred_check
          %p64 = pneg %p63
        $region30: #{tpu_custom_call.1} parent=23 // pred_check_branch
          %66 = sbr.rel (%p64) target = $region32
        $region31: #{tpu_custom_call.1} parent=23 // pred_region
          %s67 = ssub.s32 2, %s62
          %s68 = smul.u32 %s14, 512
          %s69 = sadd.s32 %s67, %s68
          %s70 = smul.addr %s69, 16
          %s71 = scalar_lea.hbm %s1, %s70
          %s72 = scalar_lea.vmem [#allocation2], 2
          %s74 = sshll.u32 %s72, 4
          %s75 = int_to_ptr.vmem [resolvable:$true] %s74
          %77 = dma.hbm_to_vmem [thread:$0]  %s71, 7936, %s75, [#allocation4], 2048, 2048, 124
          %s78 = sadd.s32 124, %s68
          %s79 = smul.addr %s78, 16
          %s80 = scalar_lea.hbm %s1, %s79
          %s81 = scalar_lea.sflag [#allocation4], 1
          %s83 = sshll.u32 [#allocation3], 4
          %s84 = int_to_ptr.vmem [resolvable:$true] %s83
          %86 = dma.hbm_to_vmem [thread:$0]  %s80, 256, %s84, %s81, 2048, 128, 4
          %s87 = smul.addr %s68, 16
          %s88 = scalar_lea.hbm %s1, %s87
          %s89 = scalar_lea.vmem [#allocation3], 4
          %s90 = scalar_lea.sflag [#allocation4], 2
          %s92 = sshll.u32 %s89, 4
          %s93 = int_to_ptr.vmem [resolvable:$true] %s92
          %95 = dma.hbm_to_vmem [thread:$0]  %s88, 256, %s93, %s90, 2048, 128, 4
          %s96 = smul.u32 4, 4
          %s97 = smul.u32 %s96, 1
          %s98 = sshll.u32 %s97, 4
          %99 = dma.done %s81, %s98
          %s100 = sshll.u32 %s97, 4
          %101 = dma.done %s90, %s100
          %s102 = ssub.s32 4, %s62
          %s103 = scalar_lea.vmem [#allocation3], %s102
          %v104 = vld [vmem:[%s103] sm:$0x3]
          %v105 = vld [vmem:[%s103 + $0x8] sm:$0x3]
          %v106 = vld [vmem:[%s103 + $0x10] sm:$0x3]
          %v107 = vld [vmem:[%s103 + $0x18] sm:$0x3]
          %108 = vst [vmem:[#allocation2] sm:$0x3] %v104
          %109 = vst [vmem:[#allocation2 + $0x80] sm:$0x3] %v105
          %110 = vst [vmem:[#allocation2 + $0x100] sm:$0x3] %v106
          %111 = vst [vmem:[#allocation2 + $0x180] sm:$0x3] %v107
          %s112 = scalar_lea.vmem [#allocation3], %s67
          %v113 = vld [vmem:[%s112] sm:$0x3]
          %v114 = vld [vmem:[%s112 + $0x8] sm:$0x3]
          %v115 = vld [vmem:[%s112 + $0x10] sm:$0x3]
          %v116 = vld [vmem:[%s112 + $0x18] sm:$0x3]
          %117 = vst [vmem:[#allocation2 + $0x7e] sm:$0x3] %v113
          %118 = vst [vmem:[#allocation2 + $0xfe] sm:$0x3] %v114
          %119 = vst [vmem:[#allocation2 + $0x17e] sm:$0x3] %v115
          %120 = vst [vmem:[#allocation2 + $0x1fe] sm:$0x3] %v116
          %s121 = smul.u32 4, 124
          %s122 = smul.u32 %s121, 1
          %s123 = sshll.u32 %s122, 4
          %124 = dma.done [#allocation4], %s123
          %s125 = smul.addr %s68, 16
          %s126 = scalar_lea.hbm %s2, %s125
          %s127 = scalar_lea.sflag [#allocation4], 3
          // Predicated region
          $region33: #{tpu_custom_call.1} parent=31 // pred_check
            _
          $region34: #{tpu_custom_call.1} parent=31 // pred_check_branch
            %129 = sbr.rel target = $region36
          $region35: #{tpu_custom_call.1} parent=31 // pred_region
            %130 = sst [smem:[#allocation12]] [#allocation11]
            %131 = sst [smem:[#allocation13]] [#allocation10]
          $region36: #{tpu_custom_call.1} parent=31 // pred_fallthru
            _
          %133 = shalt.err (0)
          %s135 = sshll.u32 [#allocation2], 4
          %s136 = int_to_ptr.vmem [resolvable:$true] %s135
          %138 = dma.vmem_to_hbm [thread:$0]  %s136, 8192, %s126, %s127
          %s139 = smul.u32 4, 128
          %s140 = smul.u32 %s139, 1
          %s141 = sshll.u32 %s140, 4
          %142 = dma.done %s127, %s141
        $region32: #{tpu_custom_call.1} parent=23 // pred_fallthru
          _
      $region24: #{tpu_custom_call.1} parent=5 // pred_fallthru
        _
    $region6: #{tpu_custom_call.1} parent=1 // loop_footer
      %s13 = sadd.s32 1, %s9
    $region7: #{tpu_custom_call.1} parent=1 // loop_footer_branch
      %8 = sbr.rel target = $region3
    $region8: #{tpu_custom_call.1} parent=1 // loop_exit
      _
    %143 = vsyncpa [#allocation6], 1
    %s144 = scalar_lea.sflag [#allocation6], 1
    %145 = vsyncpa %s144, 1
  %146 = vsyncmov [#allocation4]
  %s147 = vpop.sfrf %146
  %p148 = scmp.eq.s32.totalorder %s147, 0
  %p149 = pneg %p148
  %151 = shalt.err (%p149)
  %s152 = scalar_lea.sflag [#allocation4], 1
  %153 = vsyncmov %s152
  %s154 = vpop.sfrf %153
  %p155 = scmp.eq.s32.totalorder %s154, 0
  %p156 = pneg %p155
  %158 = shalt.err (%p156)
  %s159 = scalar_lea.sflag [#allocation4], 2
  %160 = vsyncmov %s159
  %s161 = vpop.sfrf %160
  %p162 = scmp.eq.s32.totalorder %s161, 0
  %p163 = pneg %p162
  %165 = shalt.err (%p163)
  %s166 = scalar_lea.sflag [#allocation4], 3
  %167 = vsyncmov %s166
  %s168 = vpop.sfrf %167
  %p169 = scmp.eq.s32.totalorder %s168, 0
  %p170 = pneg %p169
  %172 = shalt.err (%p170)

</llo_original>
